<compile_context>
chip_gen: v5e
topology: v5e:2x2
jax: 0.10.0
libtpu: 0.0.40
codegen_flags: <defaults>
</compile_context>

<pallas_src>
import functools
import math
from typing import NamedTuple, Tuple

import jax
import jax.numpy as jnp
from jax.experimental import pallas as pl
from jax.experimental.pallas import tpu as pltpu

_LANE = 128
_SUBLANE = 8
_VREG_FILE_BYTES = 64 * 4 * 1024  # 64 vregs x 4 KiB


def _round_up(x, m):
    return ((x + m - 1) // m) * m


def _vmem_budget_bytes():
    """~80% of per-TensorCore VMEM, leaving headroom for compiler scratch."""
    cap = 64 * 1024 * 1024  # conservative default (== v7x per-TC capacity)
    try:
        cap = int(pltpu.get_tpu_info().vmem_capacity_bytes)
    except Exception:
        pass
    return max(16 * 1024 * 1024, int(cap * 0.8))


def _resident_spec(shape):
    """BlockSpec for an operand whose block never changes across the grid.

    Single-buffered: a second buffer saves no DMA for a constant block index,
    it only wastes VMEM."""
    index_map = lambda i: (0, 0)
    try:
        return pl.BlockSpec(shape, index_map, pipeline_mode=pl.Buffered(1))
    except (TypeError, AttributeError):  # jax without pipeline_mode support
        return pl.BlockSpec(shape, index_map)


class MLPParams(NamedTuple):
    """Padded, compute-dtype parameters (built once at init, not per call)."""
    weights: Tuple[jax.Array, ...]   # layer i: (K_i, N_i) = (in, out)
    biases: Tuple[jax.Array, ...]    # layer i: (1, N_i) float32
    in_dim: int
    out_dim: int
    compute_dtype: jnp.dtype


def prepare_mlp_params(weights, biases, *, compute_dtype=jnp.bfloat16):
    """Pad intermediate layer widths to lane multiples (zero pad => no-op) and
    cast weights to the MXU input dtype.  Hoisted out of the forward path so a
    call does not pay an extra HBM pass over the parameters.

    weights[i]: (in_i, out_i)  -- transpose of PyTorch nn.Linear.weight
    biases[i]:  (out_i,)
    """
    num_layers = len(weights)
    assert num_layers >= 1 and len(biases) == num_layers
    compute_dtype = jnp.dtype(compute_dtype)
    in_dim = int(weights[0].shape[0])
    out_dims = [int(w.shape[1]) for w in weights]
    # Lane-dense INTERMEDIATE widths (they live only in VMEM/vregs); the final
    # layer keeps its natural width so we do not amplify HBM output traffic.
    pad_out = [_round_up(d, _LANE) for d in out_dims[:-1]] + [out_dims[-1]]
    in_dims = [in_dim] + pad_out[:-1]

    w_p, b_p = [], []
    for i, (w, b) in enumerate(zip(weights, biases)):
        w_pad = jnp.pad(w, ((0, in_dims[i] - w.shape[0]),
                            (0, pad_out[i] - w.shape[1])))
        b_pad = jnp.pad(b, (0, pad_out[i] - b.shape[0])).reshape(1, -1)
        w_p.append(w_pad.astype(compute_dtype))
        b_p.append(b_pad.astype(jnp.float32))
    return MLPParams(tuple(w_p), tuple(b_p), in_dim, out_dims[-1],
                     compute_dtype)


# --------------------------------------------------------------------------
# Fused path: all parameters resident in VMEM, 1-D grid over row tiles.
# --------------------------------------------------------------------------
def _mlp_fused_kernel(*refs, num_layers, compute_dtype, stage_hidden):
    """num_layers x (x @ W + b), ReLU on all but the last layer.

    Rows of the tile are fully independent; the ragged last grid block relies
    on that (OOB input rows hold garbage, matching output rows are not
    stored).  Do not add cross-row reductions without revisiting this.
    """
    x_ref = refs[0]
    if stage_hidden:
        out_ref, h_ref = refs[-2], refs[-1]
        param_refs = refs[1:-2]
    else:
        out_ref, h_ref = refs[-1], None
        param_refs = refs[1:-1]

    x = x_ref[...]
    if x.dtype != compute_dtype:
        # Cast on the VPU under MXU cover -- cheaper than a wrapper-side HBM
        # pass rewriting x in bf16 and re-reading it.
        x = x.astype(compute_dtype)
    for i in range(num_layers):
        w = param_refs[2 * i][...]
        b = param_refs[2 * i + 1][...]                 # (1, N_i) float32
        y = jnp.dot(x, w, preferred_element_type=jnp.float32) + b
        if i < num_layers - 1:
            y = jnp.maximum(y, 0.0).astype(compute_dtype)   # F.relu
            if h_ref is not None:
                # Stage through VMEM only when the (tm x hidden) intermediate
                # would spill out of the 64-vreg register file.
                h_ref[...] = y
                x = h_ref[...]
            else:
                x = y
        else:
            out_ref[...] = y.astype(out_ref.dtype)


# --------------------------------------------------------------------------
# Fallback path: per-layer M/N/K-tiled matmul (params too big for VMEM).
# --------------------------------------------------------------------------
def _linear_kernel(x_ref, w_ref, b_ref, o_ref, acc_ref, *, relu, compute_dtype):
    @pl.when(pl.program_id(2) == 0)
    def _():
        acc_ref[...] = jnp.zeros_like(acc_ref)

    xb = x_ref[...]
    if xb.dtype != compute_dtype:
        xb = xb.astype(compute_dtype)
    acc_ref[...] += jnp.dot(xb, w_ref[...], preferred_element_type=jnp.float32)

    @pl.when(pl.program_id(2) == pl.num_programs(2) - 1)
    def _():
        y = acc_ref[...] + b_ref[...]
        if relu:
            y = jnp.maximum(y, 0.0)
        o_ref[...] = y.astype(o_ref.dtype)


def _pick_div_tile(dim, candidates):
    for c in candidates:
        if dim % c == 0:
            return c
    return dim


def _linear_pallas(x2d, w, b, *, relu, out_dtype, compute_dtype, budget):
    """Single Linear(+ReLU) with M/N/K tiling + f32 accumulator scratch."""
    M, K = x2d.shape
    _, N = w.shape
    x_b = x2d.dtype.itemsize
    w_b = w.dtype.itemsize
    o_b = jnp.dtype(out_dtype).itemsize

    # K must tile exactly (ragged reduction blocks would feed garbage into the
    # accumulator); M/N raggedness is safe (independent dims, masked stores).
    tk = _pick_div_tile(K, (2048, 1024, 512, 256, 128)) if K % _LANE == 0 else K
    tn = _pick_div_tile(N, (512, 256, 128)) if N % _LANE == 0 else N

    tm = 8
    for cand in (1024, 512, 256, 128, 64, 32, 16, 8):
        need = (2 * cand * tk * x_b + 2 * tk * tn * w_b
                + 2 * cand * tn * o_b + cand * tn * 4 + 2 * tn * 4)
        if need <= budget:
            tm = cand
            break
    tm = min(tm, _round_up(M, _SUBLANE))

    grid = (pl.cdiv(M, tm), pl.cdiv(N, tn), K // tk)
    kernel = functools.partial(_linear_kernel, relu=relu,
                               compute_dtype=compute_dtype)
    return pl.pallas_call(
        kernel,
        out_shape=jax.ShapeDtypeStruct((M, N), out_dtype),
        grid_spec=pltpu.PrefetchScalarGridSpec(
            num_scalar_prefetch=0,
            grid=grid,
            in_specs=[
                pl.BlockSpec((tm, tk), lambda i, j, k: (i, k)),
                pl.BlockSpec((tk, tn), lambda i, j, k: (k, j)),
                pl.BlockSpec((1, tn), lambda i, j, k: (0, j)),
            ],
            out_specs=pl.BlockSpec((tm, tn), lambda i, j, k: (i, j)),
            scratch_shapes=[pltpu.VMEM((tm, tn), jnp.float32)],
        ),
        compiler_params=pltpu.CompilerParams(
            dimension_semantics=("parallel", "parallel", "arbitrary"),
            vmem_limit_bytes=int(budget),
        ),
    )(x2d, w, b)


# --------------------------------------------------------------------------
# Public forward.
# --------------------------------------------------------------------------
def mlp_pallas(x, params: MLPParams, *, row_tile=None, force_unfused=False):
    """Forward pass of the DETR-style MLP.

    x: (..., input_dim); params from prepare_mlp_params().
    Output keeps x.dtype; matmul accumulation is always f32.
    """
    num_layers = len(params.weights)
    orig_shape = x.shape
    in_dim, out_dim = params.in_dim, params.out_dim
    assert orig_shape[-1] == in_dim
    out_dtype = x.dtype
    compute_dtype = params.compute_dtype

    x2d = x.reshape(-1, in_dim)            # NOTE: no dtype cast here
    M = x2d.shape[0]

    w_p, b_p = params.weights, params.biases
    x_bytes = jnp.dtype(x.dtype).itemsize
    out_bytes = jnp.dtype(out_dtype).itemsize
    cd_bytes = jnp.dtype(compute_dtype).itemsize
    w_bytes = sum(int(w.size) * w.dtype.itemsize for w in w_p)
    b_bytes = sum(int(b.size) * b.dtype.itemsize for b in b_p)
    param_bytes = w_bytes + b_bytes        # single-buffered (resident) params

    inter = [int(w.shape[1]) for w in w_p[:-1]]
    hidden_pad = inter[0] if inter else 0
    budget = _vmem_budget_bytes()

    # Per-row VMEM cost: double-buffered x tile + double-buffered out tile +
    # (worst case) the staged intermediate.
    per_row = (2 * in_dim * x_bytes + 2 * out_dim * out_bytes
               + hidden_pad * cd_bytes)
    min_rows = min(_round_up(M, _SUBLANE), 64)
    use_fused = (not force_unfused
                 and param_bytes + per_row * min_rows <= budget
                 and (not inter or all(d == hidden_pad for d in inter)))

    if not use_fused:
        # K/N-tiled per-layer fallback for transformer-scale parameter sets.
        # TODO(synk): fuse the layer chain with pltpu.emit_pipeline over K
        # instead of separate pallas_calls when this path matters for perf.
        h = x2d
        for i in range(num_layers):
            last = i == num_layers - 1
            h = _linear_pallas(h, w_p[i], b_p[i], relu=not last,
                               out_dtype=out_dtype if last else compute_dtype,
                               compute_dtype=compute_dtype, budget=budget)
        return h.reshape(*orig_shape[:-1], out_dim)

    # ---- fused path ------------------------------------------------------
    if row_tile is None:
        row_tile = 1024 if budget >= 80 * 1024 * 1024 else 512
    avail = budget - param_bytes
    tm_vmem = max(_SUBLANE, (avail // max(per_row, 1)) // _SUBLANE * _SUBLANE)
    tm = min(_round_up(row_tile, _SUBLANE), _round_up(M, _SUBLANE), tm_vmem)
    tm = max(_SUBLANE, tm)
    grid = (pl.cdiv(M, tm),)

    # Stage the intermediate activation through VMEM only if it would spill
    # the register file (> ~half of 64 x 4 KiB vregs).
    stage_hidden = bool(inter) and (tm * hidden_pad * cd_bytes
                                    > _VREG_FILE_BYTES // 2)

    in_specs = [pl.BlockSpec((tm, in_dim), lambda i: (i, 0))]
    for w, b in zip(w_p, b_p):
        in_specs.append(_resident_spec(w.shape))
        in_specs.append(_resident_spec(b.shape))
    out_specs = pl.BlockSpec((tm, out_dim), lambda i: (i, 0))

    scratch_shapes = []
    if stage_hidden:
        scratch_shapes.append(pltpu.VMEM((tm, hidden_pad), compute_dtype))

    vmem_need = (param_bytes
                 + 2 * tm * in_dim * x_bytes
                 + 2 * tm * out_dim * out_bytes
                 + (tm * hidden_pad * cd_bytes if stage_hidden else 0))
    vmem_limit = int(min(budget, max(vmem_need + (4 << 20), 16 << 20)))

    flops = 2 * M * sum(int(w.shape[0]) * int(w.shape[1]) for w in w_p)
    bytes_accessed = (M * in_dim * x_bytes + param_bytes
                      + M * out_dim * out_bytes)
    cost = pl.CostEstimate(flops=flops, transcendentals=0,
                           bytes_accessed=bytes_accessed)

    kernel = functools.partial(_mlp_fused_kernel, num_layers=num_layers,
                               compute_dtype=compute_dtype,
                               stage_hidden=stage_hidden)

    flat_params = []
    for w, b in zip(w_p, b_p):
        flat_params.extend([w, b])

    y2d = pl.pallas_call(
        kernel,
        out_shape=jax.ShapeDtypeStruct((M, out_dim), out_dtype),
        grid_spec=pltpu.PrefetchScalarGridSpec(
            num_scalar_prefetch=0,
            grid=grid,
            in_specs=in_specs,
            out_specs=out_specs,
            scratch_shapes=scratch_shapes,
        ),
        compiler_params=pltpu.CompilerParams(
            dimension_semantics=("parallel",),
            vmem_limit_bytes=vmem_limit,
        ),
        cost_estimate=cost,
    )(x2d, *flat_params)

    return y2d.reshape(*orig_shape[:-1], out_dim)


# --------------------------------------------------------------------------
# Init + references.
# --------------------------------------------------------------------------
def init_mlp_params(key, input_dim, hidden_dim, output_dim, num_layers):
    """nn.Linear-style init (uniform +/- 1/sqrt(fan_in)); weights stored (in, out)."""
    h = [hidden_dim] * (num_layers - 1)
    dims_in = [input_dim] + h
    dims_out = h + [output_dim]
    weights, biases = [], []
    for n, k in zip(dims_in, dims_out):
        key, kw, kb = jax.random.split(key, 3)
        bound = 1.0 / math.sqrt(n)
        weights.append(jax.random.uniform(kw, (n, k), jnp.float32, -bound, bound))
        biases.append(jax.random.uniform(kb, (k,), jnp.float32, -bound, bound))
    return weights, biases


def mlp_reference(x, weights, biases):
    """Plain-JAX f32 reference of the PyTorch forward."""
    n = len(weights)
    for i, (w, b) in enumerate(zip(weights, biases)):
        x = x @ w + b
        if i < n - 1:
            x = jax.nn.relu(x)
    return x


def mlp_reference_bf16(x, weights, biases):
    """Reference mirroring the bf16-matmul / f32-accumulate kernel path."""
    n = len(weights)
    h = x.astype(jnp.bfloat16)
    for i, (w, b) in enumerate(zip(weights, biases)):
        y = jnp.dot(h, w.astype(jnp.bfloat16),
                    preferred_element_type=jnp.float32) + b
        if i < n - 1:
            h = jax.nn.relu(y).astype(jnp.bfloat16)
        else:
            return y.astype(x.dtype)


if __name__ == "__main__":
    # MLP(input_dim=32, hidden=64, output_dim=4, num_layers=3) on (2, 8, 32).
    input_dim, hidden_dim, output_dim, num_layers = 32, 64, 4, 3
    batch, seq = 2, 8

    key = jax.random.PRNGKey(0)
    key, kx = jax.random.split(key)
    x = jax.random.normal(kx, (batch, seq, input_dim), jnp.float32)
    weights, biases = init_mlp_params(key, input_dim, hidden_dim, output_dim,
                                      num_layers)

    # Parameters are prepared ONCE (padding + dtype cast hoisted out of the
    # per-call forward path).
    params_f32 = prepare_mlp_params(weights, biases, compute_dtype=jnp.float32)
    params_bf16 = prepare_mlp_params(weights, biases, compute_dtype=jnp.bfloat16)

    y_ref = mlp_reference(x, weights, biases)

    # Explicit f32 MXU path: tight match against the plain-JAX reference.
    y_f32 = jax.block_until_ready(mlp_pallas(x, params_f32))
    assert y_f32.shape == (batch, seq, output_dim), y_f32.shape
    assert jnp.allclose(y_f32, y_ref, atol=1e-5, rtol=1e-4), "f32 mismatch"

    # Default bf16-MXU-input / f32-accumulate path (native on v5e/v6e/v7x).
    y_bf16 = jax.block_until_ready(mlp_pallas(x, params_bf16))
    y_ref_bf16 = mlp_reference_bf16(x, weights, biases)
    assert y_bf16.shape == (batch, seq, output_dim), y_bf16.shape
    assert jnp.allclose(y_bf16, y_ref_bf16, atol=3e-2, rtol=3e-2), "bf16 mismatch"

    # Exercise the K/N-tiled fallback (used when params exceed the VMEM budget).
    y_fb = jax.block_until_ready(mlp_pallas(x, params_f32, force_unfused=True))
    assert y_fb.shape == (batch, seq, output_dim), y_fb.shape
    assert jnp.allclose(y_fb, y_ref, atol=1e-5, rtol=1e-4), "fallback mismatch"

    print("KERNEL_OK")
</pallas_src>

<mosaic_0001>
module attributes {stable_mosaic.version = 11 : i64} {
  func.func @_mlp_fused_kernel(%arg0: i32, %arg1: memref<16x32xf32, #tpu.memory_space<vmem>>, %arg2: memref<32x128xf32, #tpu.memory_space<vmem>>, %arg3: memref<1x128xf32, #tpu.memory_space<vmem>>, %arg4: memref<128x128xf32, #tpu.memory_space<vmem>>, %arg5: memref<1x128xf32, #tpu.memory_space<vmem>>, %arg6: memref<128x4xf32, #tpu.memory_space<vmem>>, %arg7: memref<1x4xf32, #tpu.memory_space<vmem>>, %arg8: memref<16x4xf32, #tpu.memory_space<vmem>>) attributes {dimension_semantics = [#tpu.dimension_semantics<parallel>], iteration_bounds = array<i64: 1>, scalar_prefetch = 0 : i64, scratch_operands = 0 : i64, tpu.core_type = #tpu.core_type<tc>, window_params = [{transform_indices = @transform_0, window_bounds = array<i64: 16, 32>}, {pipeline_mode = #tpu.pipeline_mode<synchronous>, transform_indices = @transform_1, window_bounds = array<i64: 32, 128>}, {pipeline_mode = #tpu.pipeline_mode<synchronous>, transform_indices = @transform_2, window_bounds = array<i64: 1, 128>}, {pipeline_mode = #tpu.pipeline_mode<synchronous>, transform_indices = @transform_3, window_bounds = array<i64: 128, 128>}, {pipeline_mode = #tpu.pipeline_mode<synchronous>, transform_indices = @transform_4, window_bounds = array<i64: 1, 128>}, {pipeline_mode = #tpu.pipeline_mode<synchronous>, transform_indices = @transform_5, window_bounds = array<i64: 128, 4>}, {pipeline_mode = #tpu.pipeline_mode<synchronous>, transform_indices = @transform_6, window_bounds = array<i64: 1, 4>}, {transform_indices = @transform_7, window_bounds = array<i64: 16, 4>}]} {
    %c0 = arith.constant 0 : index
    %c0_0 = arith.constant 0 : index
    %0 = vector.load %arg1[%c0, %c0_0] : memref<16x32xf32, #tpu.memory_space<vmem>>, vector<16x32xf32>
    %c0_1 = arith.constant 0 : index
    %c0_2 = arith.constant 0 : index
    %1 = vector.load %arg2[%c0_1, %c0_2] : memref<32x128xf32, #tpu.memory_space<vmem>>, vector<32x128xf32>
    %c0_3 = arith.constant 0 : index
    %c0_4 = arith.constant 0 : index
    %2 = vector.load %arg3[%c0_3, %c0_4] : memref<1x128xf32, #tpu.memory_space<vmem>>, vector<1x128xf32>
    %cst = arith.constant dense<0.000000e+00> : vector<16x128xf32>
    %3 = tpu.matmul %0, %1, %cst {dimension_numbers = #tpu.dot_dimension_numbers<[1], [0], [0], [1], [0, 0, 1, 1], [], []>} : vector<16x32xf32>, vector<32x128xf32>, vector<16x128xf32> -> vector<16x128xf32>
    %4 = vector.broadcast %2 : vector<1x128xf32> to vector<16x128xf32>
    %5 = arith.addf %3, %4 : vector<16x128xf32>
    %cst_5 = arith.constant 0.000000e+00 : f32
    %6 = vector.broadcast %cst_5 : f32 to vector<16x128xf32>
    %7 = arith.maximumf %5, %6 : vector<16x128xf32>
    %c0_6 = arith.constant 0 : index
    %c0_7 = arith.constant 0 : index
    %8 = vector.load %arg4[%c0_6, %c0_7] : memref<128x128xf32, #tpu.memory_space<vmem>>, vector<128x128xf32>
    %c0_8 = arith.constant 0 : index
    %c0_9 = arith.constant 0 : index
    %9 = vector.load %arg5[%c0_8, %c0_9] : memref<1x128xf32, #tpu.memory_space<vmem>>, vector<1x128xf32>
    %cst_10 = arith.constant dense<0.000000e+00> : vector<16x128xf32>
    %10 = tpu.matmul %7, %8, %cst_10 {dimension_numbers = #tpu.dot_dimension_numbers<[1], [0], [0], [1], [0, 0, 1, 1], [], []>} : vector<16x128xf32>, vector<128x128xf32>, vector<16x128xf32> -> vector<16x128xf32>
    %11 = vector.broadcast %9 : vector<1x128xf32> to vector<16x128xf32>
    %12 = arith.addf %10, %11 : vector<16x128xf32>
    %cst_11 = arith.constant 0.000000e+00 : f32
    %13 = vector.broadcast %cst_11 : f32 to vector<16x128xf32>
    %14 = arith.maximumf %12, %13 : vector<16x128xf32>
    %c0_12 = arith.constant 0 : index
    %c0_13 = arith.constant 0 : index
    %15 = vector.load %arg6[%c0_12, %c0_13] : memref<128x4xf32, #tpu.memory_space<vmem>>, vector<128x4xf32>
    %c0_14 = arith.constant 0 : index
    %c0_15 = arith.constant 0 : index
    %16 = vector.load %arg7[%c0_14, %c0_15] : memref<1x4xf32, #tpu.memory_space<vmem>>, vector<1x4xf32>
    %cst_16 = arith.constant dense<0.000000e+00> : vector<16x4xf32>
    %17 = tpu.matmul %14, %15, %cst_16 {dimension_numbers = #tpu.dot_dimension_numbers<[1], [0], [0], [1], [0, 0, 1, 1], [], []>} : vector<16x128xf32>, vector<128x4xf32>, vector<16x4xf32> -> vector<16x4xf32>
    %18 = vector.broadcast %16 : vector<1x4xf32> to vector<16x4xf32>
    %19 = arith.addf %17, %18 : vector<16x4xf32>
    %c0_17 = arith.constant 0 : index
    %c0_18 = arith.constant 0 : index
    %20 = vector.load %arg8[%c0_17, %c0_18] : memref<16x4xf32, #tpu.memory_space<vmem>>, vector<16x4xf32>
    tpu.vector_store %arg8[%c0_17, %c0_18], %19 {strides = array<i32>} : memref<16x4xf32, #tpu.memory_space<vmem>>, vector<16x4xf32>,
    return
  }
  func.func @transform_0(%arg0: i32) -> (i32, i32) {
    %c0_i32 = arith.constant 0 : i32
    %c0_i32_0 = arith.constant 0 : i32
    return %arg0, %c0_i32 : i32, i32
  }
  func.func @transform_1(%arg0: i32) -> (i32, i32) {
    %c0_i32 = arith.constant 0 : i32
    %c0_i32_0 = arith.constant 0 : i32
    %c0_i32_1 = arith.constant 0 : i32
    return %c0_i32, %c0_i32_0 : i32, i32
  }
  func.func @transform_2(%arg0: i32) -> (i32, i32) {
    %c0_i32 = arith.constant 0 : i32
    %c0_i32_0 = arith.constant 0 : i32
    %c0_i32_1 = arith.constant 0 : i32
    return %c0_i32, %c0_i32_0 : i32, i32
  }
  func.func @transform_3(%arg0: i32) -> (i32, i32) {
    %c0_i32 = arith.constant 0 : i32
    %c0_i32_0 = arith.constant 0 : i32
    %c0_i32_1 = arith.constant 0 : i32
    return %c0_i32, %c0_i32_0 : i32, i32
  }
  func.func @transform_4(%arg0: i32) -> (i32, i32) {
    %c0_i32 = arith.constant 0 : i32
    %c0_i32_0 = arith.constant 0 : i32
    %c0_i32_1 = arith.constant 0 : i32
    return %c0_i32, %c0_i32_0 : i32, i32
  }
  func.func @transform_5(%arg0: i32) -> (i32, i32) {
    %c0_i32 = arith.constant 0 : i32
    %c0_i32_0 = arith.constant 0 : i32
    %c0_i32_1 = arith.constant 0 : i32
    return %c0_i32, %c0_i32_0 : i32, i32
  }
  func.func @transform_6(%arg0: i32) -> (i32, i32) {
    %c0_i32 = arith.constant 0 : i32
    %c0_i32_0 = arith.constant 0 : i32
    %c0_i32_1 = arith.constant 0 : i32
    return %c0_i32, %c0_i32_0 : i32, i32
  }
  func.func @transform_7(%arg0: i32) -> (i32, i32) {
    %c0_i32 = arith.constant 0 : i32
    %c0_i32_0 = arith.constant 0 : i32
    return %arg0, %c0_i32 : i32, i32
  }
}

</mosaic_0001>

<llo_original>
// kernel: tpu_custom_call.1
$region0: #{tpu_custom_call.1}
  #allocation0 [shape = 'u32[]', space=smem, size = 0x4, offset = 0x4, fixed_abs, tag = 'smem constant byte address 0x4 - core index']
  #allocation1 [shape = 'u32[72,128]{1,0:T(1,128)}', space=vmem, size = 0x9000, scoped, tag = 'internal scratch']
  %s0 = inlined_call_operand.hbm [shape: f32[16,32], index: 0, kind: input, shape index: {}]
  %s1 = inlined_call_operand.hbm [shape: f32[32,128], index: 1, kind: input, shape index: {}]
  %s2 = inlined_call_operand.vmem [shape: f32[1,128], index: 2, kind: input, shape index: {}]
  %s3 = inlined_call_operand.vmem [shape: f32[128,128], index: 3, kind: input, shape index: {}]
  %s4 = inlined_call_operand.vmem [shape: f32[1,128], index: 4, kind: input, shape index: {}]
  %s5 = inlined_call_operand.vmem [shape: f32[128,4], index: 5, kind: input, shape index: {}]
  %s6 = inlined_call_operand.vmem [shape: f32[1,4], index: 6, kind: input, shape index: {}]
  %s7 = inlined_call_operand.vmem [shape: f32[16,4], index: 7, kind: output, shape index: {}]
  %s8 = sld [smem:[#allocation0]]
  $region46: #{tpu_custom_call.1} parent=0
    _
  %s10 = ssub.s32 1, %s8
  %s11 = scalar_select 0, %s10, %s8
  $region1: #{tpu_custom_call.1} parent=0
    #allocation2 [shape = 'u8[8192]{0}', space=vmem, size = 0x2000, scoped, tag = 'input window, operand 0, single buffered']
    #allocation3 [shape = 's32[1]{0}', space=sflag, size = 0x4, scoped, tag = 'scoped memory for tpu_custom_call.1']
    #allocation4 [shape = 'u8[16384]{0}', space=vmem, size = 0x4000, scoped, tag = 'input window, operand 1, single buffered']
    #allocation5 [shape = 's32[1]{0}', space=sflag, size = 0x4, scoped, tag = 'scoped memory for tpu_custom_call.1']
    %12 = vsyncpa [#allocation3], 0
    %13 = vsyncpa [#allocation5], 0
    // Predicated region
    $region2: #{tpu_custom_call.1} parent=1 // pred_check
      _
    $region3: #{tpu_custom_call.1} parent=1 // pred_check_branch
      %15 = sbr.rel (0) target = $region5
    $region4: #{tpu_custom_call.1} parent=1 // pred_region
      %17 = vsyncadd [#allocation3], 0
      %s18 = sshll.u32 %s0, 4
      %s19 = int_to_ptr.hbm [resolvable:$true] %s18
      %s20 = sshll.u32 [#allocation2], 4
      %s21 = int_to_ptr.vmem [resolvable:$true] %s20
      %26 = dma.hbm_to_vmem [thread:$0]  %s19, 256, %s21, [#allocation3], 128, 128, 8
    $region5: #{tpu_custom_call.1} parent=1 // pred_fallthru
      _
    // Predicated region
    $region6: #{tpu_custom_call.1} parent=1 // pred_check
      _
    $region7: #{tpu_custom_call.1} parent=1 // pred_check_branch
      %28 = sbr.rel (0) target = $region9
    $region8: #{tpu_custom_call.1} parent=1 // pred_region
      %30 = vsyncadd [#allocation5], 0
      %s31 = sshll.u32 %s1, 4
      %s32 = int_to_ptr.hbm [resolvable:$true] %s31
      %s33 = sshll.u32 [#allocation4], 4
      %s34 = int_to_ptr.vmem [resolvable:$true] %s33
      %39 = dma.hbm_to_vmem [thread:$0]  %s32, 512, %s34, [#allocation5], 128, 128, 8
    $region9: #{tpu_custom_call.1} parent=1 // pred_fallthru
      _
    // Predicated region
    $region10: #{tpu_custom_call.1} parent=1 // pred_check
      _
    $region11: #{tpu_custom_call.1} parent=1 // pred_check_branch
      %41 = sbr.rel (0) target = $region13
    $region12: #{tpu_custom_call.1} parent=1 // pred_region
      _
    $region13: #{tpu_custom_call.1} parent=1 // pred_fallthru
      _
    // Predicated region
    $region14: #{tpu_custom_call.1} parent=1 // pred_check
      _
    $region15: #{tpu_custom_call.1} parent=1 // pred_check_branch
      %43 = sbr.rel (0) target = $region17
    $region16: #{tpu_custom_call.1} parent=1 // pred_region
      _
    $region17: #{tpu_custom_call.1} parent=1 // pred_fallthru
      _
    // Predicated region
    $region18: #{tpu_custom_call.1} parent=1 // pred_check
      _
    $region19: #{tpu_custom_call.1} parent=1 // pred_check_branch
      %45 = sbr.rel (0) target = $region21
    $region20: #{tpu_custom_call.1} parent=1 // pred_region
      _
    $region21: #{tpu_custom_call.1} parent=1 // pred_fallthru
      _
    // Predicated region
    $region22: #{tpu_custom_call.1} parent=1 // pred_check
      _
    $region23: #{tpu_custom_call.1} parent=1 // pred_check_branch
      %47 = sbr.rel (0) target = $region25
    $region24: #{tpu_custom_call.1} parent=1 // pred_region
      _
    $region25: #{tpu_custom_call.1} parent=1 // pred_fallthru
      _
    // Predicated region
    $region26: #{tpu_custom_call.1} parent=1 // pred_check
      _
    $region27: #{tpu_custom_call.1} parent=1 // pred_check_branch
      %49 = sbr.rel (0) target = $region29
    $region28: #{tpu_custom_call.1} parent=1 // pred_region
      _
    $region29: #{tpu_custom_call.1} parent=1 // pred_fallthru
      _
    // Predicated region
    $region30: #{tpu_custom_call.1} parent=1 // pred_check
      _
    $region31: #{tpu_custom_call.1} parent=1 // pred_check_branch
      %51 = sbr.rel (0) target = $region33
    $region32: #{tpu_custom_call.1} parent=1 // pred_region
      %53 = dma.done [#allocation3], 256
    $region33: #{tpu_custom_call.1} parent=1 // pred_fallthru
      _
    // Predicated region
    $region34: #{tpu_custom_call.1} parent=1 // pred_check
      _
    $region35: #{tpu_custom_call.1} parent=1 // pred_check_branch
      %55 = sbr.rel (0) target = $region37
    $region36: #{tpu_custom_call.1} parent=1 // pred_region
      %57 = dma.done [#allocation5], 512
    $region37: #{tpu_custom_call.1} parent=1 // pred_fallthru
      _
    %v58 = vld [vmem:[#allocation2] sm:$0xff]
    %v59 = vld [vmem:[#allocation2 + $0x8] sm:$0xff]
    %v60 = vld [vmem:[#allocation4] sm:$0xff]
    %v61 = vld [vmem:[#allocation4 + $0x8] sm:$0xff]
    %v62 = vld [vmem:[#allocation4 + $0x10] sm:$0xff]
    %v63 = vld [vmem:[#allocation4 + $0x18] sm:$0xff]
    %v64 = vld [vmem:[%s2] sm:$0x1]
    %v66 = vperm.slane %v64, 0
    %vm68 = vcmask 261120
    %v70 = vsel %vm68, %v58, 0
    %v73 = vsel %vm68, %v59, 0
    %75 = vmatpush.msra.mxu0 0.0
    %76 = vmatpush.msra.mxu0 0.0
    %77 = vmatpush.msra.mxu0 0.0
    %78 = vmatpush.msra.mxu0 0.0
    %79 = vmatpush.msra.mxu0 0.0
    %80 = vmatpush.msra.mxu0 0.0
    %81 = vmatpush.msra.mxu0 0.0
    %82 = vmatpush.msra.mxu0 0.0
    %83 = vmatpush.msra.mxu0 0.0
    %84 = vmatpush.msra.mxu0 0.0
    %85 = vmatpush.msra.mxu0 0.0
    %86 = vmatpush.msra.mxu0 0.0
    %87 = vmatpush.msra.mxu0 %v63
    %88 = vmatpush.msra.mxu0 %v62
    %89 = vmatpush.msra.mxu0 %v61
    %90 = vmatpush.msra.mxu0 %v60
    %91 = vmatmul.f32.gmra.mxu0 %v70
    %v92 = vpop.f32.mrf.mxu0
    %v93 = vadd.f32 %v66, %v92
    %94 = vmatmul.f32.gmra.mxu0 %v73
    %v95 = vpop.f32.mrf.mxu0
    %v96 = vadd.f32 %v66, %v95
    %97 = vdwg.mxu0
    %v98 = vmax.f32 %v93, 0.0
    %v99 = vmax.f32 %v96, 0.0
    %v100 = vld [vmem:[%s3] sm:$0xff]
    %v101 = vld [vmem:[%s3 + $0x8] sm:$0xff]
    %v102 = vld [vmem:[%s3 + $0x10] sm:$0xff]
    %v103 = vld [vmem:[%s3 + $0x18] sm:$0xff]
    %v104 = vld [vmem:[%s3 + $0x20] sm:$0xff]
    %v105 = vld [vmem:[%s3 + $0x28] sm:$0xff]
    %v106 = vld [vmem:[%s3 + $0x30] sm:$0xff]
    %v107 = vld [vmem:[%s3 + $0x38] sm:$0xff]
    %v108 = vld [vmem:[%s3 + $0x40] sm:$0xff]
    %v109 = vld [vmem:[%s3 + $0x48] sm:$0xff]
    %v110 = vld [vmem:[%s3 + $0x50] sm:$0xff]
    %v111 = vld [vmem:[%s3 + $0x58] sm:$0xff]
    %v112 = vld [vmem:[%s3 + $0x60] sm:$0xff]
    %v113 = vld [vmem:[%s3 + $0x68] sm:$0xff]
    %v114 = vld [vmem:[%s3 + $0x70] sm:$0xff]
    %v115 = vld [vmem:[%s3 + $0x78] sm:$0xff]
    %v116 = vld [vmem:[%s4] sm:$0x1]
    %v118 = vperm.slane %v116, 0
    %120 = vmatpush.msra.mxu0 %v115
    %121 = vmatpush.msra.mxu0 %v114
    %122 = vmatpush.msra.mxu0 %v113
    %123 = vmatpush.msra.mxu0 %v112
    %124 = vmatpush.msra.mxu0 %v111
    %125 = vmatpush.msra.mxu0 %v110
    %126 = vmatpush.msra.mxu0 %v109
    %127 = vmatpush.msra.mxu0 %v108
    %128 = vmatpush.msra.mxu0 %v107
    %129 = vmatpush.msra.mxu0 %v106
    %130 = vmatpush.msra.mxu0 %v105
    %131 = vmatpush.msra.mxu0 %v104
    %132 = vmatpush.msra.mxu0 %v103
    %133 = vmatpush.msra.mxu0 %v102
    %134 = vmatpush.msra.mxu0 %v101
    %135 = vmatpush.msra.mxu0 %v100
    %136 = vmatmul.f32.gmra.mxu0 %v98
    %v137 = vpop.f32.mrf.mxu0
    %v138 = vadd.f32 %v118, %v137
    %139 = vmatmul.f32.gmra.mxu0 %v99
    %v140 = vpop.f32.mrf.mxu0
    %v141 = vadd.f32 %v118, %v140
    %142 = vdwg.mxu0
    %v143 = vmax.f32 %v138, 0.0
    %v144 = vmax.f32 %v141, 0.0
    %v145 = vld [vmem:[%s5] sm:$0xff]
    %v146 = vld [vmem:[%s5 + $0x8] sm:$0xff]
    %v147 = vld [vmem:[%s5 + $0x10] sm:$0xff]
    %v148 = vld [vmem:[%s5 + $0x18] sm:$0xff]
    %v149 = vld [vmem:[%s5 + $0x20] sm:$0xff]
    %v150 = vld [vmem:[%s5 + $0x28] sm:$0xff]
    %v151 = vld [vmem:[%s5 + $0x30] sm:$0xff]
    %v152 = vld [vmem:[%s5 + $0x38] sm:$0xff]
    %v153 = vld [vmem:[%s5 + $0x40] sm:$0xff]
    %v154 = vld [vmem:[%s5 + $0x48] sm:$0xff]
    %v155 = vld [vmem:[%s5 + $0x50] sm:$0xff]
    %v156 = vld [vmem:[%s5 + $0x58] sm:$0xff]
    %v157 = vld [vmem:[%s5 + $0x60] sm:$0xff]
    %v158 = vld [vmem:[%s5 + $0x68] sm:$0xff]
    %v159 = vld [vmem:[%s5 + $0x70] sm:$0xff]
    %v160 = vld [vmem:[%s5 + $0x78] sm:$0xff]
    %v161 = vld [vmem:[%s6] sm:$0x1]
    %v163 = vperm.slane %v161, 0
    %165 = vmatpush.msra.mxu0 %v160
    %166 = vmatpush.msra.mxu0 %v159
    %167 = vmatpush.msra.mxu0 %v158
    %168 = vmatpush.msra.mxu0 %v157
    %169 = vmatpush.msra.mxu0 %v156
    %170 = vmatpush.msra.mxu0 %v155
    %171 = vmatpush.msra.mxu0 %v154
    %172 = vmatpush.msra.mxu0 %v153
    %173 = vmatpush.msra.mxu0 %v152
    %174 = vmatpush.msra.mxu0 %v151
    %175 = vmatpush.msra.mxu0 %v150
    %176 = vmatpush.msra.mxu0 %v149
    %177 = vmatpush.msra.mxu0 %v148
    %178 = vmatpush.msra.mxu0 %v147
    %179 = vmatpush.msra.mxu0 %v146
    %180 = vmatpush.msra.mxu0 %v145
    %181 = vmatmul.f32.gmra.mxu0 %v143
    %v182 = vpop.f32.mrf.mxu0
    %v183 = vadd.f32 %v163, %v182
    %184 = vmatmul.f32.gmra.mxu0 %v144
    %v185 = vpop.f32.mrf.mxu0
    %v186 = vadd.f32 %v163, %v185
    %187 = vdwg.mxu0
    %vm188 = vcmask 31744
    %189 = vst.msk [vmem:[%s7] sm:$0xff] %vm188, %v183
    %190 = vst.msk [vmem:[%s7 + $0x8] sm:$0xff] %vm188, %v186
    // Predicated region
    $region38: #{tpu_custom_call.1} parent=1 // pred_check
      _
    $region39: #{tpu_custom_call.1} parent=1 // pred_check_branch
      %192 = sbr.rel (0) target = $region41
    $region40: #{tpu_custom_call.1} parent=1 // pred_region
      _
    $region41: #{tpu_custom_call.1} parent=1 // pred_fallthru
      _
    // Predicated region
    $region42: #{tpu_custom_call.1} parent=1 // pred_check
      _
    $region43: #{tpu_custom_call.1} parent=1 // pred_check_branch
      %194 = sbr.rel (0) target = $region45
    $region44: #{tpu_custom_call.1} parent=1 // pred_region
      _
    $region45: #{tpu_custom_call.1} parent=1 // pred_fallthru
      _
    %195 = vsyncpa [#allocation3], 1
    %196 = vsyncpa [#allocation5], 1

</llo_original>
